<compile_context>
chip_gen: v7x
topology: tpu7x:2x2x1
jax: 0.10.0
libtpu: 0.0.40
codegen_flags: <defaults>
</compile_context>

<pallas_src>
import numpy as np
import jax
import jax.numpy as jnp
from jax.experimental import pallas as pl
from jax.experimental.pallas import tpu as pltpu


def _round_up(x, m):
    return ((x + m - 1) // m) * m


# ----------------------------------------------------------------------------
# Kernel: one lane-dense MXU matmul + bias + ReLU per (row-block, col-block).
# ----------------------------------------------------------------------------
def _spatial_block_kernel(x_ref, m_ref, b_ref, o_ref):
    # x_ref: (Rb, CinVp)   activations, rows = (batch, time)
    # m_ref: (CinVp, Tn)   slab of the fused (conv1x1 . A*edge . BN + residual)
    # b_ref: (1, Tn)       fused bias (f32)
    # o_ref: (Rb, Tn)
    acc = jnp.dot(x_ref[...], m_ref[...], preferred_element_type=jnp.float32)
    acc = acc + b_ref[...]                      # broadcast over rows (f32)
    o_ref[...] = jnp.maximum(acc, 0.0).astype(o_ref.dtype)


# ----------------------------------------------------------------------------
# Tiling helpers
# ----------------------------------------------------------------------------
def _vmem_capacity_bytes():
    try:
        return int(pltpu.get_tpu_info().vmem_capacity_bytes)
    except Exception:
        return 64 << 20          # v7x per-TensorCore VMEM (most restrictive)


def _pick_row_block(rows, bytes_per_row, target_bytes=4 << 20):
    """Row block: multiple of 16 (bf16 sublane packing), ~4 MiB of
    activations per buffer, and small enough to give >=2 grid steps."""
    rb = max(16, (target_bytes // max(bytes_per_row, 1)) // 16 * 16)
    if rows > 16:
        rb = min(rb, _round_up(-(-rows // 2), 16))   # ensure >= 2 steps
    if rb >= 512:
        rb = (rb // 256) * 256                        # MXU-friendly M dim
    return rows if rb >= rows else rb


def _pick_col_block(rb, cin_vp, cout_vp, x_item, w_item, budget):
    """Largest lane-multiple column tile (dividing cout_vp) that fits the
    VMEM budget with double-buffered x/out and single-buffered M."""
    def fits(tn):
        need = (2 * rb * cin_vp * x_item       # x block, double-buffered
                + 2 * rb * tn * x_item         # out block, double-buffered
                + cin_vp * tn * w_item         # fused-operator slab
                + tn * 4 + (1 << 20))          # bias + slack
        return need <= budget
    m = cout_vp // 128
    for d in sorted((d for d in range(1, m + 1) if m % d == 0), reverse=True):
        tn = 128 * d
        if fits(tn):
            return tn, True
    return 128, False


# ----------------------------------------------------------------------------
# Wrapper
# ----------------------------------------------------------------------------
def spatial_basic_block(x, A, edge, params, max_graph_distance, *,
                        eps=1e-5, io_dtype=jnp.bfloat16, weight_dtype=None,
                        row_block=None, col_block=None):
    """Forward pass of mpgcn Spatial_Basic_Block (eval-mode BatchNorm).

    x      : (N, Cin, T, V)
    A      : (>=K, V, V) graph hop matrices, K = max_graph_distance + 1
    edge   : same shape as A (edge-importance weights)
    params : w_gcn (K*Cout, Cin), b_gcn (K*Cout,), bn_{gamma,beta,mean,var}
             (Cout,), and optionally w_res/b_res/bnr_* for the conv+BN
             residual branch (used when Cin != Cout).
    """
    N, Cin, T, V = x.shape
    K = max_graph_distance + 1
    Aeff = (A[:K] * edge[:K]).astype(jnp.float32)                 # (K, V, V)

    w_gcn = params["w_gcn"].astype(jnp.float32)                   # (K*Cout, Cin)
    b_gcn = params["b_gcn"].astype(jnp.float32)                   # (K*Cout,)
    assert w_gcn.shape[0] % K == 0
    Cout = w_gcn.shape[0] // K
    Wg = w_gcn.reshape(K, Cout, Cin)
    bg = b_gcn.reshape(K, Cout)

    # eval-mode BatchNorm -> per-channel scale / shift
    s2 = params["bn_gamma"] / jnp.sqrt(params["bn_var"] + eps)
    h2 = params["bn_beta"] - params["bn_mean"] * s2

    # ---- fold conv1x1 + graph mixing + BN into one (Cin,V,Cout,V) operator --
    # M[(cin,v),(c,w)] = s2[c] * sum_k Wg[k,c,cin] * Aeff[k,v,w]
    M = jnp.einsum("kci,kvw->ivcw", Wg, Aeff) * s2[None, None, :, None]
    colsum = Aeff.sum(axis=1)                                     # (K, V)
    bias = jnp.einsum("kc,kw->cw", bg, colsum) * s2[:, None] + h2[:, None]

    # ---- fold the residual branch into the same operator --------------------
    eyeV = jnp.eye(V, dtype=jnp.float32)
    if "w_res" in params:
        sr = params["bnr_gamma"] / jnp.sqrt(params["bnr_var"] + eps)
        hr = params["bnr_beta"] - params["bnr_mean"] * sr
        Wr = params["w_res"].astype(jnp.float32)                  # (Cout, Cin)
        br = params["b_res"].astype(jnp.float32)                  # (Cout,)
        M = M + (Wr.T * sr[None, :])[:, None, :, None] * eyeV[None, :, None, :]
        bias = bias + (sr * br + hr)[:, None]
    else:
        if Cin != Cout:
            raise ValueError("identity residual requires Cin == Cout")
        eyeC = jnp.eye(Cout, dtype=jnp.float32)
        M = M + eyeC[:, None, :, None] * eyeV[None, :, None, :]

    # ---- lane-dense padding to multiples of 128 ------------------------------
    cin_v, cout_v = Cin * V, Cout * V
    cin_vp, cout_vp = _round_up(cin_v, 128), _round_up(cout_v, 128)

    wdt = io_dtype if weight_dtype is None else weight_dtype
    M2 = (jnp.zeros((cin_vp, cout_vp), jnp.float32)
          .at[:cin_v, :cout_v].set(M.reshape(cin_v, cout_v)).astype(wdt))
    B2 = (jnp.zeros((1, cout_vp), jnp.float32)
          .at[:, :cout_v].set(bias.reshape(1, cout_v)))

    # activations as a lane-dense (rows, Cin*V) slab, rows = (n, t)
    X2 = jnp.transpose(x, (0, 2, 1, 3)).reshape(N * T, cin_v).astype(io_dtype)
    if cin_vp != cin_v:
        X2 = jnp.pad(X2, ((0, 0), (0, cin_vp - cin_v)))

    rows = N * T
    x_item = jnp.dtype(io_dtype).itemsize
    w_item = jnp.dtype(wdt).itemsize

    cap = _vmem_capacity_bytes()
    budget = (cap * 3) // 4            # headroom for Mosaic internal scratch

    rb = row_block or _pick_row_block(rows, (cin_vp + cout_vp) * x_item)
    if col_block is not None:
        tn = col_block
    else:
        tn, ok = _pick_col_block(rb, cin_vp, cout_vp, x_item, w_item, budget)
        while not ok and rb > 16:
            rb = max(16, ((rb // 2) // 16) * 16)
            tn, ok = _pick_col_block(rb, cin_vp, cout_vp, x_item, w_item, budget)

    row_steps = pl.cdiv(rows, rb)
    col_steps = pl.cdiv(cout_vp, tn)
    grid = (col_steps, row_steps)      # M slab changes only on the slow axis

    vmem_need = (2 * rb * cin_vp * x_item + 2 * rb * tn * x_item
                 + cin_vp * tn * w_item + tn * 4)
    vmem_limit = int(min(max(2 * vmem_need, 8 << 20), cap - (2 << 20)))

    cost = pl.CostEstimate(
        flops=2 * rows * cin_vp * cout_vp,
        transcendentals=0,
        bytes_accessed=int(col_steps * rows * cin_vp * x_item
                           + cin_vp * cout_vp * w_item
                           + rows * cout_vp * x_item + cout_vp * 4),
    )

    def run(single_buffer_consts):
        const_kw = (dict(pipeline_mode=pl.Buffered(1))
                    if single_buffer_consts else {})
        return pl.pallas_call(
            _spatial_block_kernel,
            out_shape=jax.ShapeDtypeStruct((rows, cout_vp), io_dtype),
            grid=grid,
            in_specs=[
                pl.BlockSpec((rb, cin_vp), lambda c, r: (r, 0)),
                pl.BlockSpec((cin_vp, tn), lambda c, r: (0, c), **const_kw),
                pl.BlockSpec((1, tn), lambda c, r: (0, c), **const_kw),
            ],
            out_specs=pl.BlockSpec((rb, tn), lambda c, r: (r, c)),
            compiler_params=pltpu.CompilerParams(
                dimension_semantics=("parallel", "parallel"),
                vmem_limit_bytes=vmem_limit,
            ),
            cost_estimate=cost,
        )(X2, M2, B2)

    try:
        out2 = run(True)
    except Exception:
        # pipeline_mode=pl.Buffered(1) unsupported on this jax version:
        # fall back to default double-buffering of the constant operands.
        out2 = run(False)

    if cout_vp != cout_v:
        out2 = out2[:, :cout_v]
    return out2.reshape(N, T, Cout, V).transpose(0, 2, 1, 3)


# ----------------------------------------------------------------------------
# Pure-JAX reference (mirrors the PyTorch forward, eval-mode BatchNorm)
# ----------------------------------------------------------------------------
def reference(x, A, edge, params, max_graph_distance, eps=1e-5):
    N, Cin, T, V = x.shape
    K = max_graph_distance + 1
    Aeff = A[:K] * edge[:K]
    w_gcn, b_gcn = params["w_gcn"], params["b_gcn"]
    Cout = w_gcn.shape[0] // K

    g = jnp.einsum("oc,nctv->notv", w_gcn, x) + b_gcn[None, :, None, None]
    g = g.reshape(N, K, Cout, T, V)
    z = jnp.einsum("nkctv,kvw->nctw", g, Aeff)
    s2 = params["bn_gamma"] / jnp.sqrt(params["bn_var"] + eps)
    h2 = params["bn_beta"] - params["bn_mean"] * s2
    z = z * s2[None, :, None, None] + h2[None, :, None, None]

    if "w_res" in params:
        r = jnp.einsum("oc,nctv->notv", params["w_res"], x) \
            + params["b_res"][None, :, None, None]
        sr = params["bnr_gamma"] / jnp.sqrt(params["bnr_var"] + eps)
        hr = params["bnr_beta"] - params["bnr_mean"] * sr
        r = r * sr[None, :, None, None] + hr[None, :, None, None]
    else:
        r = x
    return jnp.maximum(z + r, 0.0)


# ----------------------------------------------------------------------------
# Test
# ----------------------------------------------------------------------------
def _make_params(key, cin, cout, K, residual_conv):
    ks = jax.random.split(key, 12)
    p = {
        "w_gcn": 0.2 * jax.random.normal(ks[0], (K * cout, cin), jnp.float32),
        "b_gcn": 0.1 * jax.random.normal(ks[1], (K * cout,), jnp.float32),
        "bn_gamma": 1.0 + 0.1 * jax.random.normal(ks[2], (cout,), jnp.float32),
        "bn_beta": 0.1 * jax.random.normal(ks[3], (cout,), jnp.float32),
        "bn_mean": 0.1 * jax.random.normal(ks[4], (cout,), jnp.float32),
        "bn_var": 0.5 + jnp.abs(jax.random.normal(ks[5], (cout,), jnp.float32)),
    }
    if residual_conv:
        p.update({
            "w_res": 0.2 * jax.random.normal(ks[6], (cout, cin), jnp.float32),
            "b_res": 0.1 * jax.random.normal(ks[7], (cout,), jnp.float32),
            "bnr_gamma": 1.0 + 0.1 * jax.random.normal(ks[8], (cout,), jnp.float32),
            "bnr_beta": 0.1 * jax.random.normal(ks[9], (cout,), jnp.float32),
            "bnr_mean": 0.1 * jax.random.normal(ks[10], (cout,), jnp.float32),
            "bnr_var": 0.5 + jnp.abs(jax.random.normal(ks[11], (cout,), jnp.float32)),
        })
    return p


if __name__ == "__main__":
    N, T = 2, 16
    max_graph_distance = 2
    K = max_graph_distance + 1
    key = jax.random.PRNGKey(0)

    # (V, cin, cout): identity residual, conv+BN residual, V=25 padding path
    configs = [(16, 8, 8), (16, 8, 16), (25, 8, 8)]
    for idx, (V, cin, cout) in enumerate(configs):
        k_a, k_e, k_x, k_p = jax.random.split(jax.random.fold_in(key, idx), 4)
        A = 0.3 * jax.random.normal(k_a, (K, V, V), jnp.float32)
        edge = 1.0 + 0.1 * jax.random.normal(k_e, (K, V, V), jnp.float32)
        params = _make_params(k_p, cin, cout, K, residual_conv=(cin != cout))
        x = jax.random.normal(k_x, (N, cin, T, V), jnp.float32)
        # quantize the input once so the bf16-I/O kernel and the f32 reference
        # see identical input values
        x_q = x.astype(jnp.bfloat16).astype(jnp.float32)

        out = jax.block_until_ready(
            spatial_basic_block(x_q, A, edge, params, max_graph_distance,
                                io_dtype=jnp.bfloat16))
        ref = jax.block_until_ready(
            reference(x_q, A, edge, params, max_graph_distance))

        # tolerance accounts for bf16 HBM I/O and bf16 MXU operands
        # (f32 accumulation); f32 reference uses unquantized weights.
        np.testing.assert_allclose(np.asarray(out, dtype=np.float32),
                                   np.asarray(ref),
                                   rtol=5e-2, atol=5e-2)

    print("KERNEL_OK")
</pallas_src>

<mosaic_0001>
module attributes {stable_mosaic.version = 11 : i64} {
  func.func @_spatial_block_kernel(%arg0: i32, %arg1: i32, %arg2: memref<16x128xbf16, #tpu.memory_space<vmem>>, %arg3: memref<128x128xbf16, #tpu.memory_space<vmem>>, %arg4: memref<1x128xf32, #tpu.memory_space<vmem>>, %arg5: memref<16x128xbf16, #tpu.memory_space<vmem>>) attributes {dimension_semantics = [#tpu.dimension_semantics<parallel>, #tpu.dimension_semantics<parallel>], iteration_bounds = array<i64: 1, 2>, scalar_prefetch = 0 : i64, scratch_operands = 0 : i64, tpu.core_type = #tpu.core_type<tc>, window_params = [{transform_indices = @transform_0, window_bounds = array<i64: 16, 128>}, {pipeline_mode = #tpu.pipeline_mode<synchronous>, transform_indices = @transform_1, window_bounds = array<i64: 128, 128>}, {pipeline_mode = #tpu.pipeline_mode<synchronous>, transform_indices = @transform_2, window_bounds = array<i64: 1, 128>}, {transform_indices = @transform_3, window_bounds = array<i64: 16, 128>}]} {
    %c0 = arith.constant 0 : index
    %c0_0 = arith.constant 0 : index
    %0 = vector.load %arg2[%c0, %c0_0] : memref<16x128xbf16, #tpu.memory_space<vmem>>, vector<16x128xbf16>
    %c0_1 = arith.constant 0 : index
    %c0_2 = arith.constant 0 : index
    %1 = vector.load %arg3[%c0_1, %c0_2] : memref<128x128xbf16, #tpu.memory_space<vmem>>, vector<128x128xbf16>
    %cst = arith.constant dense<0.000000e+00> : vector<16x128xf32>
    %2 = tpu.matmul %0, %1, %cst {dimension_numbers = #tpu.dot_dimension_numbers<[1], [0], [0], [1], [0, 0, 1, 1], [], []>} : vector<16x128xbf16>, vector<128x128xbf16>, vector<16x128xf32> -> vector<16x128xf32>
    %c0_3 = arith.constant 0 : index
    %c0_4 = arith.constant 0 : index
    %3 = vector.load %arg4[%c0_3, %c0_4] : memref<1x128xf32, #tpu.memory_space<vmem>>, vector<1x128xf32>
    %4 = vector.broadcast %3 : vector<1x128xf32> to vector<16x128xf32>
    %5 = arith.addf %2, %4 : vector<16x128xf32>
    %cst_5 = arith.constant 0.000000e+00 : f32
    %6 = vector.broadcast %cst_5 : f32 to vector<16x128xf32>
    %7 = arith.maximumf %5, %6 : vector<16x128xf32>
    %8 = arith.truncf %7 : vector<16x128xf32> to vector<16x128xbf16>
    %c0_6 = arith.constant 0 : index
    %c0_7 = arith.constant 0 : index
    %9 = vector.load %arg5[%c0_6, %c0_7] : memref<16x128xbf16, #tpu.memory_space<vmem>>, vector<16x128xbf16>
    tpu.vector_store %arg5[%c0_6, %c0_7], %8 {strides = array<i32>} : memref<16x128xbf16, #tpu.memory_space<vmem>>, vector<16x128xbf16>,
    return
  }
  func.func @transform_0(%arg0: i32, %arg1: i32) -> (i32, i32) {
    %c0_i32 = arith.constant 0 : i32
    %c0_i32_0 = arith.constant 0 : i32
    return %arg1, %c0_i32 : i32, i32
  }
  func.func @transform_1(%arg0: i32, %arg1: i32) -> (i32, i32) {
    %c0_i32 = arith.constant 0 : i32
    %c0_i32_0 = arith.constant 0 : i32
    return %c0_i32, %arg0 : i32, i32
  }
  func.func @transform_2(%arg0: i32, %arg1: i32) -> (i32, i32) {
    %c0_i32 = arith.constant 0 : i32
    %c0_i32_0 = arith.constant 0 : i32
    return %c0_i32, %arg0 : i32, i32
  }
  func.func @transform_3(%arg0: i32, %arg1: i32) -> (i32, i32) {
    %c0_i32 = arith.constant 0 : i32
    return %arg1, %arg0 : i32, i32
  }
}

module attributes {stable_mosaic.version = 11 : i64} {
  func.func @_spatial_block_kernel(%arg0: i32, %arg1: i32, %arg2: memref<16x128xbf16, #tpu.memory_space<vmem>>, %arg3: memref<128x128xbf16, #tpu.memory_space<vmem>>, %arg4: memref<1x128xf32, #tpu.memory_space<vmem>>, %arg5: memref<16x128xbf16, #tpu.memory_space<vmem>>) attributes {dimension_semantics = [#tpu.dimension_semantics<parallel>, #tpu.dimension_semantics<parallel>], iteration_bounds = array<i64: 1, 2>, scalar_prefetch = 0 : i64, scratch_operands = 0 : i64, tpu.core_type = #tpu.core_type<tc>, window_params = [{transform_indices = @transform_0, window_bounds = array<i64: 16, 128>}, {transform_indices = @transform_1, window_bounds = array<i64: 128, 128>}, {transform_indices = @transform_2, window_bounds = array<i64: 1, 128>}, {transform_indices = @transform_3, window_bounds = array<i64: 16, 128>}]} {
    %c0 = arith.constant 0 : index
    %c0_0 = arith.constant 0 : index
    %0 = vector.load %arg2[%c0, %c0_0] : memref<16x128xbf16, #tpu.memory_space<vmem>>, vector<16x128xbf16>
    %c0_1 = arith.constant 0 : index
    %c0_2 = arith.constant 0 : index
    %1 = vector.load %arg3[%c0_1, %c0_2] : memref<128x128xbf16, #tpu.memory_space<vmem>>, vector<128x128xbf16>
    %cst = arith.constant dense<0.000000e+00> : vector<16x128xf32>
    %2 = tpu.matmul %0, %1, %cst {dimension_numbers = #tpu.dot_dimension_numbers<[1], [0], [0], [1], [0, 0, 1, 1], [], []>} : vector<16x128xbf16>, vector<128x128xbf16>, vector<16x128xf32> -> vector<16x128xf32>
    %c0_3 = arith.constant 0 : index
    %c0_4 = arith.constant 0 : index
    %3 = vector.load %arg4[%c0_3, %c0_4] : memref<1x128xf32, #tpu.memory_space<vmem>>, vector<1x128xf32>
    %4 = vector.broadcast %3 : vector<1x128xf32> to vector<16x128xf32>
    %5 = arith.addf %2, %4 : vector<16x128xf32>
    %cst_5 = arith.constant 0.000000e+00 : f32
    %6 = vector.broadcast %cst_5 : f32 to vector<16x128xf32>
    %7 = arith.maximumf %5, %6 : vector<16x128xf32>
    %8 = arith.truncf %7 : vector<16x128xf32> to vector<16x128xbf16>
    %c0_6 = arith.constant 0 : index
    %c0_7 = arith.constant 0 : index
    %9 = vector.load %arg5[%c0_6, %c0_7] : memref<16x128xbf16, #tpu.memory_space<vmem>>, vector<16x128xbf16>
    tpu.vector_store %arg5[%c0_6, %c0_7], %8 {strides = array<i32>} : memref<16x128xbf16, #tpu.memory_space<vmem>>, vector<16x128xbf16>,
    return
  }
  func.func @transform_0(%arg0: i32, %arg1: i32) -> (i32, i32) {
    %c0_i32 = arith.constant 0 : i32
    %c0_i32_0 = arith.constant 0 : i32
    return %arg1, %c0_i32 : i32, i32
  }
  func.func @transform_1(%arg0: i32, %arg1: i32) -> (i32, i32) {
    %c0_i32 = arith.constant 0 : i32
    %c0_i32_0 = arith.constant 0 : i32
    return %c0_i32, %arg0 : i32, i32
  }
  func.func @transform_2(%arg0: i32, %arg1: i32) -> (i32, i32) {
    %c0_i32 = arith.constant 0 : i32
    %c0_i32_0 = arith.constant 0 : i32
    return %c0_i32, %arg0 : i32, i32
  }
  func.func @transform_3(%arg0: i32, %arg1: i32) -> (i32, i32) {
    %c0_i32 = arith.constant 0 : i32
    return %arg1, %arg0 : i32, i32
  }
}

</mosaic_0001>

<llo_original>
// kernel: tpu_custom_call.1
$region0: #{tpu_custom_call.1}
  #allocation0 [shape = 'u32[]', space=smem, size = 0x4, offset = 0x4, fixed_abs, tag = 'smem constant byte address 0x4 - core index']
  #allocation1 [shape = 'u32[144,128]{1,0:T(1,128)}', space=vmem, size = 0x12000, scoped, tag = 'internal scratch']
  %s0 = inlined_call_operand.hbm [shape: bf16[32,128], index: 0, kind: input, shape index: {}]
  %s1 = inlined_call_operand.hbm [shape: bf16[128,128], index: 1, kind: input, shape index: {}]
  %s2 = inlined_call_operand.vmem [shape: f32[1,128], index: 2, kind: input, shape index: {}]
  %s3 = inlined_call_operand.hbm [shape: bf16[32,128], index: 3, kind: output, shape index: {}]
  %s4 = sld [smem:[#allocation0]]
  $region53: #{tpu_custom_call.1} parent=0
    _
  %s6 = ssub.s32 1, %s4
  %s7 = scalar_select 0, %s6, %s4
  $region1: #{tpu_custom_call.1} parent=0
    #allocation2 [shape = 'u8[8192]{0}', space=vmem, size = 0x2000, scoped, tag = 'input window, operand 0']
    #allocation3 [shape = 's32[2]{0}', space=sflag, size = 0x8, scoped, tag = 'scoped memory for tpu_custom_call.1']
    #allocation4 [shape = 's32[2]{0}', space=sflag, size = 0x8, scoped, tag = 'scoped memory for tpu_custom_call.1']
    #allocation5 [shape = 'u8[32768]{0}', space=vmem, size = 0x8000, scoped, tag = 'input window, operand 1, single buffered']
    #allocation6 [shape = 's32[1]{0}', space=sflag, size = 0x4, scoped, tag = 'scoped memory for tpu_custom_call.1']
    #allocation7 [shape = 'u8[8192]{0}', space=vmem, size = 0x2000, scoped, tag = 'output window, operand 0']
    %8 = vsyncpa [#allocation3], 0
    %s9 = scalar_lea.sflag [#allocation3], 1
    %10 = vsyncpa %s9, 0
    %11 = vsyncpa [#allocation6], 0
    %12 = vsyncpa [#allocation4], 0
    %s13 = scalar_lea.sflag [#allocation4], 1
    %14 = vsyncpa %s13, 0
    loop: start=0, step=1, limit=4
    $region2: #{tpu_custom_call.1} parent=1 // loop_pre_header
      _
    $region3: #{tpu_custom_call.1} parent=1 // loop_header
      %s16 = sphi 0, %s20
      %p17 = scmp.ge.s32.totalorder %s16, 4
      %s23 = sphi 0, %s35
      %s24 = sphi 0, %s31
      %s25 = sphi 0, %s23
      %s26 = sphi 0, %s24
      %s27 = sphi 0, %s25
      %s28 = sphi 0, %s26
      %s38 = sphi 0, %s40
      %s41 = sphi 0, %s38
      %s42 = sphi 0, %s41
      %s58 = sphi 0, %s42
      %s64 = sphi 0, %s66
      %s67 = sphi 0, %s64
      %s68 = sphi 0, %s67
      %s84 = sphi 0, %s68
      %s90 = sphi 0, %s92
      %s93 = sphi 0, %s90
      %s94 = sphi 0, %s93
      %s110 = sphi 0, %s94
      %s118 = sphi 0, %s120
      %s121 = sphi 0, %s118
      %s122 = sphi 0, %s121
      %s138 = sphi 0, %s122
    $region4: #{tpu_custom_call.1} parent=1 // loop_header_branch
      %19 = sbr.rel (%p17) target = $region8
    $region5: #{tpu_custom_call.1} parent=1 // loop_body
      %s21 = ssub.s32 %s16, 1
      %s22 = ssub.s32 %s16, 2
      %s29 = sadd.s32 1, %s24
      %p30 = scmp.ge.s32.totalorder %s29, 2
      %s31 = scalar_select %p30, 0, %s29
      %s32 = sadd.s32 1, %s23
      %s33 = scalar_select %p30, %s32, %s23
      %p34 = scmp.ge.s32.totalorder %s33, 1
      %s35 = scalar_select %p34, 0, %s33
      %s36 = ssub.s32 %s24, %s31
      %p37 = scmp.eq.s32.totalorder %s36, 0
      %s39 = sadd.s32 %s38, 1
      %s40 = scalar_select %p37, %s38, %s39
      %p43 = pneg %p37
      %p44 = scmp.eq.s32.totalorder %s16, 1
      %p45 = por %p43, %p44
      %p46 = scmp.ne.s32.totalorder %s38, %s41
      %p47 = scmp.eq.s32.totalorder %s16, 0
      %p48 = por %p46, %p47
      %p49 = scmp.ne.s32.totalorder %s38, %s41
      %p50 = scmp.eq.s32.totalorder %s21, 1
      %p51 = por %p49, %p50
      %p52 = scmp.ne.s32.totalorder %s41, %s42
      %p53 = scmp.eq.s32.totalorder %s21, 0
      %p54 = por %p52, %p53
      %p55 = scmp.ne.s32.totalorder %s41, %s42
      %p56 = scmp.eq.s32.totalorder %s22, 1
      %p57 = por %p55, %p56
      %p59 = scmp.ne.s32.totalorder %s42, %s58
      %p60 = scmp.eq.s32.totalorder %s22, 0
      %p61 = por %p59, %p60
      %s62 = ssub.s32 %s23, %s35
      %p63 = scmp.eq.s32.totalorder %s62, 0
      %s65 = sadd.s32 %s64, 1
      %s66 = scalar_select %p63, %s64, %s65
      %p69 = pneg %p63
      %p70 = scmp.eq.s32.totalorder %s16, 1
      %p71 = por %p69, %p70
      %p72 = scmp.ne.s32.totalorder %s64, %s67
      %p73 = scmp.eq.s32.totalorder %s16, 0
      %p74 = por %p72, %p73
      %p75 = scmp.ne.s32.totalorder %s64, %s67
      %p76 = scmp.eq.s32.totalorder %s21, 1
      %p77 = por %p75, %p76
      %p78 = scmp.ne.s32.totalorder %s67, %s68
      %p79 = scmp.eq.s32.totalorder %s21, 0
      %p80 = por %p78, %p79
      %p81 = scmp.ne.s32.totalorder %s67, %s68
      %p82 = scmp.eq.s32.totalorder %s22, 1
      %p83 = por %p81, %p82
      %p85 = scmp.ne.s32.totalorder %s68, %s84
      %p86 = scmp.eq.s32.totalorder %s22, 0
      %p87 = por %p85, %p86
      %s88 = ssub.s32 %s23, %s35
      %p89 = scmp.eq.s32.totalorder %s88, 0
      %s91 = sadd.s32 %s90, 1
      %s92 = scalar_select %p89, %s90, %s91
      %p95 = pneg %p89
      %p96 = scmp.eq.s32.totalorder %s16, 1
      %p97 = por %p95, %p96
      %p98 = scmp.ne.s32.totalorder %s90, %s93
      %p99 = scmp.eq.s32.totalorder %s16, 0
      %p100 = por %p98, %p99
      %p101 = scmp.ne.s32.totalorder %s90, %s93
      %p102 = scmp.eq.s32.totalorder %s21, 1
      %p103 = por %p101, %p102
      %p104 = scmp.ne.s32.totalorder %s93, %s94
      %p105 = scmp.eq.s32.totalorder %s21, 0
      %p106 = por %p104, %p105
      %p107 = scmp.ne.s32.totalorder %s93, %s94
      %p108 = scmp.eq.s32.totalorder %s22, 1
      %p109 = por %p107, %p108
      %p111 = scmp.ne.s32.totalorder %s94, %s110
      %p112 = scmp.eq.s32.totalorder %s22, 0
      %p113 = por %p111, %p112
      %s114 = ssub.s32 %s24, %s31
      %s115 = ssub.s32 %s23, %s35
      %s116 = sor.u32 %s114, %s115
      %p117 = scmp.eq.s32.totalorder %s116, 0
      %s119 = sadd.s32 %s118, 1
      %s120 = scalar_select %p117, %s118, %s119
      %p123 = pneg %p117
      %p124 = scmp.eq.s32.totalorder %s16, 1
      %p125 = por %p123, %p124
      %p126 = scmp.ne.s32.totalorder %s118, %s121
      %p127 = scmp.eq.s32.totalorder %s16, 0
      %p128 = por %p126, %p127
      %p129 = scmp.ne.s32.totalorder %s118, %s121
      %p130 = scmp.eq.s32.totalorder %s21, 1
      %p131 = por %p129, %p130
      %p132 = scmp.ne.s32.totalorder %s121, %s122
      %p133 = scmp.eq.s32.totalorder %s21, 0
      %p134 = por %p132, %p133
      %p135 = scmp.ne.s32.totalorder %s121, %s122
      %p136 = scmp.eq.s32.totalorder %s22, 1
      %p137 = por %p135, %p136
      %p139 = scmp.ne.s32.totalorder %s122, %s138
      %p140 = scmp.eq.s32.totalorder %s22, 0
      %p141 = por %p139, %p140
      %p142 = scmp.le.s32.totalorder 1, %s16
      %p143 = scmp.lt.s32.totalorder %s16, 3
      %p144 = pnand %p142, %p143
      %p145 = pneg %p144
      // Predicated region
      $region9: #{tpu_custom_call.1} parent=5 // pred_check
        _
      $region10: #{tpu_custom_call.1} parent=5 // pred_check_branch
        %147 = sbr.rel (%p144) target = $region12
      $region11: #{tpu_custom_call.1} parent=5 // pred_region
        %s148 = ssub.s32 %s16, 1
        // Predicated region
        $region13: #{tpu_custom_call.1} parent=11 // pred_check
          %p149 = pneg %p80
        $region14: #{tpu_custom_call.1} parent=11 // pred_check_branch
          %151 = sbr.rel (%p149) target = $region16
        $region15: #{tpu_custom_call.1} parent=11 // pred_region
          %s153 = ssub.s32 1024, 1024
          %154 = vsyncadd [#allocation6], %s153
          %s155 = smul.addr %s25, 64
          %s156 = scalar_lea.hbm %s1, %s155
          %s157 = sshll.u32 [#allocation5], 4
          %s158 = int_to_ptr.vmem [resolvable:$true] %s157
          %163 = dma.hbm_to_vmem [thread:$0]  %s156, 1024, %s158, [#allocation6], 64, 64, 4
        $region16: #{tpu_custom_call.1} parent=11 // pred_fallthru
          _
        // Predicated region
        $region17: #{tpu_custom_call.1} parent=11 // pred_check
          %p164 = pneg %p106
        $region18: #{tpu_custom_call.1} parent=11 // pred_check_branch
          %166 = sbr.rel (%p164) target = $region20
        $region19: #{tpu_custom_call.1} parent=11 // pred_region
          %p167 = scmp.lt.s32.totalorder %s25, 0
          %s168 = scalar_select %p167, %s25, 0
          %s169 = scalar_lea.vmem %s2, %s168
        $region20: #{tpu_custom_call.1} parent=11 // pred_fallthru
          _
      $region12: #{tpu_custom_call.1} parent=5 // pred_fallthru
        _
      %p170 = scmp.lt.s32.totalorder %s16, 2
      // Predicated region
      $region21: #{tpu_custom_call.1} parent=5 // pred_check
        %p171 = pneg %p170
      $region22: #{tpu_custom_call.1} parent=5 // pred_check_branch
        %173 = sbr.rel (%p171) target = $region24
      $region23: #{tpu_custom_call.1} parent=5 // pred_region
        // Predicated region
        $region25: #{tpu_custom_call.1} parent=23 // pred_check
          %p174 = pneg %p48
        $region26: #{tpu_custom_call.1} parent=23 // pred_check_branch
          %176 = sbr.rel (%p174) target = $region28
        $region27: #{tpu_custom_call.1} parent=23 // pred_region
          %s177 = sand.u32 %s38, 1
          %s178 = scalar_lea.sflag [#allocation3], %s177
          %s179 = sand.u32 %s38, 1
          %s180 = smul.addr %s179, 8
          %s181 = scalar_lea.vmem [#allocation2], %s180
          %s182 = smul.u32 2, %s24
          %s184 = ssub.s32 128, 128
          %185 = vsyncadd %s178, %s184
          %s186 = smul.addr %s182, 64
          %s187 = scalar_lea.hbm %s0, %s186
          %s188 = sshll.u32 %s181, 4
          %s189 = int_to_ptr.vmem [resolvable:$true] %s188
          %194 = dma.hbm_to_vmem [thread:$0]  %s187, 128, %s189, %s178, 64, 64, 4
        $region28: #{tpu_custom_call.1} parent=23 // pred_fallthru
          _
      $region24: #{tpu_custom_call.1} parent=5 // pred_fallthru
        _
      %p195 = scmp.le.s32.totalorder 1, %s16
      %p196 = scmp.lt.s32.totalorder %s16, 3
      %p197 = pnand %p195, %p196
      %p198 = pneg %p197
      // Predicated region
      $region29: #{tpu_custom_call.1} parent=5 // pred_check
        _
      $region30: #{tpu_custom_call.1} parent=5 // pred_check_branch
        %200 = sbr.rel (%p197) target = $region32
      $region31: #{tpu_custom_call.1} parent=5 // pred_region
        %s201 = ssub.s32 %s16, 1
        %s202 = sand.u32 %s41, 1
        %s203 = scalar_lea.sflag [#allocation3], %s202
        %s204 = sand.u32 %s41, 1
        %s205 = smul.addr %s204, 8
        %s206 = scalar_lea.vmem [#allocation2], %s205
        // Predicated region
        $region33: #{tpu_custom_call.1} parent=31 // pred_check
          %p207 = pneg %p54
        $region34: #{tpu_custom_call.1} parent=31 // pred_check_branch
          %209 = sbr.rel (%p207) target = $region36
        $region35: #{tpu_custom_call.1} parent=31 // pred_region
          %210 = dma.done %s203, 128
        $region36: #{tpu_custom_call.1} parent=31 // pred_fallthru
          _
        // Predicated region
        $region37: #{tpu_custom_call.1} parent=31 // pred_check
          %p211 = pneg %p80
        $region38: #{tpu_custom_call.1} parent=31 // pred_check_branch
          %213 = sbr.rel (%p211) target = $region40
        $region39: #{tpu_custom_call.1} parent=31 // pred_region
          %214 = dma.done [#allocation6], 1024
        $region40: #{tpu_custom_call.1} parent=31 // pred_fallthru
          _
        %s215 = sand.u32 %s41, 1
        %s216 = scalar_lea.sflag [#allocation3], %s215
        %s217 = sand.u32 %s41, 1
        %s218 = smul.addr %s217, 8
        %s219 = scalar_lea.vmem [#allocation2], %s218
        %p220 = pneg %p54
        %p221 = pneg %p51
        %p222 = pneg %p80
        %p223 = pneg %p77
        %p224 = scmp.lt.s32.totalorder %s25, 0
        %s225 = scalar_select %p224, %s25, 0
        %s226 = scalar_lea.vmem %s2, %s225
        %p227 = pneg %p106
        %p228 = pneg %p103
        %p229 = pneg %p134
        %p230 = pneg %p131
        %s231 = sand.u32 %s121, 1
        %s232 = scalar_lea.sflag [#allocation4], %s231
        %s233 = sand.u32 %s121, 1
        %s234 = smul.addr %s233, 8
        %s235 = scalar_lea.vmem [#allocation7], %s234
        %s236 = smul.u32 2, %s26
        %p237 = scmp.lt.s32.totalorder %s25, 0
        %s238 = scalar_select %p237, %s25, 0
        %s239 = scalar_lea.vmem %s2, %s238
        %s240 = smul.u32 2, %s26
        %v242 = vld [vmem:[%s206] sm:$0xf]
        %v243 = vld [vmem:[%s206 + $0x4] sm:$0xf]
        %v244 = vld [vmem:[#allocation5] sm:$0xf]
        %v245 = vld [vmem:[#allocation5 + $0x4] sm:$0xf]
        %v246 = vld [vmem:[#allocation5 + $0x8] sm:$0xf]
        %v247 = vld [vmem:[#allocation5 + $0xc] sm:$0xf]
        %v248 = vld [vmem:[#allocation5 + $0x10] sm:$0xf]
        %v249 = vld [vmem:[#allocation5 + $0x14] sm:$0xf]
        %v250 = vld [vmem:[#allocation5 + $0x18] sm:$0xf]
        %v251 = vld [vmem:[#allocation5 + $0x1c] sm:$0xf]
        %v252 = vld [vmem:[#allocation5 + $0x20] sm:$0xf]
        %v253 = vld [vmem:[#allocation5 + $0x24] sm:$0xf]
        %v254 = vld [vmem:[#allocation5 + $0x28] sm:$0xf]
        %v255 = vld [vmem:[#allocation5 + $0x2c] sm:$0xf]
        %v256 = vld [vmem:[#allocation5 + $0x30] sm:$0xf]
        %v257 = vld [vmem:[#allocation5 + $0x34] sm:$0xf]
        %v258 = vld [vmem:[#allocation5 + $0x38] sm:$0xf]
        %v259 = vld [vmem:[#allocation5 + $0x3c] sm:$0xf]
        %v260 = vld [vmem:[%s239] sm:$0x1]
        %v262 = vlaneseq
        %v263 = vshrl.u32 %v262, 7
        %v264 = vsub.s32 0, %v263
        %v265 = vrot.slane %v260, %v264
        %v269 = vunpack.c.l.b16 %v242
        %v270 = vunpack.c.l.b16 %v243
        %v271 = vpack.c.b16 %v270, %v269
        %v289 = vunpack.c.l.b16 %v244
        %v290 = vunpack.c.l.b16 %v245
        %v291 = vunpack.c.l.b16 %v246
        %v292 = vunpack.c.l.b16 %v247
        %v293 = vunpack.c.l.b16 %v248
        %v294 = vunpack.c.l.b16 %v249
        %v295 = vunpack.c.l.b16 %v250
        %v296 = vunpack.c.l.b16 %v251
        %v297 = vunpack.c.l.b16 %v252
        %v298 = vunpack.c.l.b16 %v253
        %v299 = vunpack.c.l.b16 %v254
        %v300 = vunpack.c.l.b16 %v255
        %v301 = vunpack.c.l.b16 %v256
        %v302 = vunpack.c.l.b16 %v257
        %v303 = vunpack.c.l.b16 %v258
        %v304 = vunpack.c.l.b16 %v259
        %v305 = vpack.c.b16 %v290, %v289
        %v306 = vpack.c.b16 %v292, %v291
        %v307 = vpack.c.b16 %v294, %v293
        %v308 = vpack.c.b16 %v296, %v295
        %v309 = vpack.c.b16 %v298, %v297
        %v310 = vpack.c.b16 %v300, %v299
        %v311 = vpack.c.b16 %v302, %v301
        %v312 = vpack.c.b16 %v304, %v303
        %321 = vmatprep.subr.bf16.mxu0 0
        %322 = vmatpush1.bf16.msra.mxu0 %v305
        %323 = vmatprep.subr.bf16.mxu0 0
        %324 = vmatpush1.bf16.msra.mxu0 %v306
        %325 = vmatprep.subr.bf16.mxu0 0
        %326 = vmatpush1.bf16.msra.mxu0 %v307
        %327 = vmatprep.subr.bf16.mxu0 0
        %328 = vmatpush1.bf16.msra.mxu0 %v308
        %329 = vmatprep.subr.bf16.mxu0 0
        %330 = vmatpush1.bf16.msra.mxu0 %v309
        %331 = vmatprep.subr.bf16.mxu0 0
        %332 = vmatpush1.bf16.msra.mxu0 %v310
        %333 = vmatprep.subr.bf16.mxu0 0
        %334 = vmatpush1.bf16.msra.mxu0 %v311
        %335 = vmatprep.subr.bf16.mxu0 0
        %336 = vmatpush1.bf16.msra.mxu0 %v312
        %337 = vmatprep.subr.bf16.mxu0 0
        %338 = vmatpush1.bf16.msra.mxu0 0
        %339 = vmatprep.subr.bf16.mxu0 0
        %340 = vmatpush1.bf16.msra.mxu0 0
        %341 = vmatprep.subr.bf16.mxu0 0
        %342 = vmatpush1.bf16.msra.mxu0 0
        %343 = vmatprep.subr.bf16.mxu0 0
        %344 = vmatpush1.bf16.msra.mxu0 0
        %345 = vmatprep.subr.bf16.mxu0 0
        %346 = vmatpush1.bf16.msra.mxu0 0
        %347 = vmatprep.subr.bf16.mxu0 0
        %348 = vmatpush1.bf16.msra.mxu0 0
        %349 = vmatprep.subr.bf16.mxu0 0
        %350 = vmatpush1.bf16.msra.mxu0 0
        %351 = vmatprep.subr.bf16.mxu0 0
        %352 = vmatpush1.bf16.msra.mxu0 0
        %353 = vmatprep.mubr.bf16.mxu0 0
        %354 = vmatmul.mubr.bf16.gmra.mrb[0].mxu0 %v271
        %v355 = vpop.f32.mrb[0].mxu0
        %v356 = vadd.f32 %v265, %v355
        %v357 = vpop.f32.mrb[0].mxu0
        %v358 = vpop.f32.mrb[0].mxu0
        %v359 = vadd.f32 %v265, %v358
        %v360 = vpop.f32.mrb[0].mxu0
        %361 = vdwg.mxu0
        %v362 = vmax.f32 %v356, 0.0
        %v363 = vmax.f32 %v359, 0.0
        %v364 = vpack.c.bf16 %v363, %v362
        %v366 = vunpack.c.l.b16 %v364
        %v367 = vunpack.c.h.b16 %v364
        %v368 = vpack.c.b16 %v366, %v366
        %v369 = vpack.c.b16 %v367, %v367
        %372 = vst [vmem:[%s235] sm:$0xf] %v368
        %373 = vst [vmem:[%s235 + $0x4] sm:$0xf] %v369
        %s374 = sand.u32 %s121, 1
        %s375 = scalar_lea.sflag [#allocation4], %s374
        %s376 = sand.u32 %s121, 1
        %s377 = smul.addr %s376, 8
        %s378 = scalar_lea.vmem [#allocation7], %s377
        // Predicated region
        $region41: #{tpu_custom_call.1} parent=31 // pred_check
          %p379 = pneg %p131
        $region42: #{tpu_custom_call.1} parent=31 // pred_check_branch
          %381 = sbr.rel (%p379) target = $region44
        $region43: #{tpu_custom_call.1} parent=31 // pred_region
          %s382 = smul.u32 2, %s26
          %s384 = ssub.s32 128, 128
          %385 = vsyncadd %s375, %s384
          %s386 = sadd.s32 %s25, %s382
          %s387 = smul.addr %s386, 64
          %s388 = scalar_lea.hbm %s3, %s387
          %s389 = sshll.u32 %s378, 4
          %s390 = int_to_ptr.vmem [resolvable:$true] %s389
          %395 = dma.vmem_to_hbm [thread:$0]  %s390, 128, %s388, %s375, 64, 64, 4
        $region44: #{tpu_custom_call.1} parent=31 // pred_fallthru
          _
      $region32: #{tpu_custom_call.1} parent=5 // pred_fallthru
        _
      %p396 = scmp.le.s32.totalorder 2, %s16
      // Predicated region
      $region45: #{tpu_custom_call.1} parent=5 // pred_check
        %p397 = pneg %p396
      $region46: #{tpu_custom_call.1} parent=5 // pred_check_branch
        %399 = sbr.rel (%p397) target = $region48
      $region47: #{tpu_custom_call.1} parent=5 // pred_region
        %s400 = ssub.s32 %s16, 2
        // Predicated region
        $region49: #{tpu_custom_call.1} parent=47 // pred_check
          %p401 = pneg %p137
        $region50: #{tpu_custom_call.1} parent=47 // pred_check_branch
          %403 = sbr.rel (%p401) target = $region52
        $region51: #{tpu_custom_call.1} parent=47 // pred_region
          %s404 = sand.u32 %s122, 1
          %s405 = scalar_lea.sflag [#allocation4], %s404
          %s406 = sand.u32 %s122, 1
          %s407 = smul.addr %s406, 8
          %s408 = scalar_lea.vmem [#allocation7], %s407
          %409 = dma.done %s405, 128
        $region52: #{tpu_custom_call.1} parent=47 // pred_fallthru
          _
      $region48: #{tpu_custom_call.1} parent=5 // pred_fallthru
        _
    $region6: #{tpu_custom_call.1} parent=1 // loop_footer
      %s20 = sadd.s32 1, %s16
    $region7: #{tpu_custom_call.1} parent=1 // loop_footer_branch
      %15 = sbr.rel target = $region3
    $region8: #{tpu_custom_call.1} parent=1 // loop_exit
      _
    %410 = vsyncpa [#allocation3], 1
    %s411 = scalar_lea.sflag [#allocation3], 1
    %412 = vsyncpa %s411, 1
    %413 = vsyncpa [#allocation6], 1
    %414 = vsyncpa [#allocation4], 1
    %s415 = scalar_lea.sflag [#allocation4], 1
    %416 = vsyncpa %s415, 1

// kernel: tpu_custom_call.1
$region0: #{tpu_custom_call.1}
  #allocation0 [shape = 'u32[]', space=smem, size = 0x4, offset = 0x4, fixed_abs, tag = 'smem constant byte address 0x4 - core index']
  #allocation1 [shape = 'u32[144,128]{1,0:T(1,128)}', space=vmem, size = 0x12000, scoped, tag = 'internal scratch']
  %s0 = inlined_call_operand.hbm [shape: bf16[32,128], index: 0, kind: input, shape index: {}]
  %s1 = inlined_call_operand.hbm [shape: bf16[128,128], index: 1, kind: input, shape index: {}]
  %s2 = inlined_call_operand.vmem [shape: f32[1,128], index: 2, kind: input, shape index: {}]
  %s3 = inlined_call_operand.hbm [shape: bf16[32,128], index: 3, kind: output, shape index: {}]
  %s4 = sld [smem:[#allocation0]]
  $region53: #{tpu_custom_call.1} parent=0
    _
  %s6 = ssub.s32 1, %s4
  %s7 = scalar_select 0, %s6, %s4
  $region1: #{tpu_custom_call.1} parent=0
    #allocation2 [shape = 'u8[8192]{0}', space=vmem, size = 0x2000, scoped, tag = 'input window, operand 0']
    #allocation3 [shape = 's32[2]{0}', space=sflag, size = 0x8, scoped, tag = 'scoped memory for tpu_custom_call.1']
    #allocation4 [shape = 's32[2]{0}', space=sflag, size = 0x8, scoped, tag = 'scoped memory for tpu_custom_call.1']
    #allocation5 [shape = 'u8[32768]{0}', space=vmem, size = 0x8000, scoped, tag = 'input window, operand 1, single buffered']
    #allocation6 [shape = 's32[1]{0}', space=sflag, size = 0x4, scoped, tag = 'scoped memory for tpu_custom_call.1']
    #allocation7 [shape = 'u8[8192]{0}', space=vmem, size = 0x2000, scoped, tag = 'output window, operand 0']
    %8 = vsyncpa [#allocation3], 0
    %s9 = scalar_lea.sflag [#allocation3], 1
    %10 = vsyncpa %s9, 0
    %11 = vsyncpa [#allocation6], 0
    %12 = vsyncpa [#allocation4], 0
    %s13 = scalar_lea.sflag [#allocation4], 1
    %14 = vsyncpa %s13, 0
    loop: start=0, step=1, limit=4
    $region2: #{tpu_custom_call.1} parent=1 // loop_pre_header
      _
    $region3: #{tpu_custom_call.1} parent=1 // loop_header
      %s16 = sphi 0, %s20
      %p17 = scmp.ge.s32.totalorder %s16, 4
      %s23 = sphi 0, %s35
      %s24 = sphi 0, %s31
      %s25 = sphi 0, %s23
      %s26 = sphi 0, %s24
      %s27 = sphi 0, %s25
      %s28 = sphi 0, %s26
      %s38 = sphi 0, %s40
      %s41 = sphi 0, %s38
      %s42 = sphi 0, %s41
      %s58 = sphi 0, %s42
      %s64 = sphi 0, %s66
      %s67 = sphi 0, %s64
      %s68 = sphi 0, %s67
      %s84 = sphi 0, %s68
      %s90 = sphi 0, %s92
      %s93 = sphi 0, %s90
      %s94 = sphi 0, %s93
      %s110 = sphi 0, %s94
      %s118 = sphi 0, %s120
      %s121 = sphi 0, %s118
      %s122 = sphi 0, %s121
      %s138 = sphi 0, %s122
    $region4: #{tpu_custom_call.1} parent=1 // loop_header_branch
      %19 = sbr.rel (%p17) target = $region8
    $region5: #{tpu_custom_call.1} parent=1 // loop_body
      %s21 = ssub.s32 %s16, 1
      %s22 = ssub.s32 %s16, 2
      %s29 = sadd.s32 1, %s24
      %p30 = scmp.ge.s32.totalorder %s29, 2
      %s31 = scalar_select %p30, 0, %s29
      %s32 = sadd.s32 1, %s23
      %s33 = scalar_select %p30, %s32, %s23
      %p34 = scmp.ge.s32.totalorder %s33, 1
      %s35 = scalar_select %p34, 0, %s33
      %s36 = ssub.s32 %s24, %s31
      %p37 = scmp.eq.s32.totalorder %s36, 0
      %s39 = sadd.s32 %s38, 1
      %s40 = scalar_select %p37, %s38, %s39
      %p43 = pneg %p37
      %p44 = scmp.eq.s32.totalorder %s16, 1
      %p45 = por %p43, %p44
      %p46 = scmp.ne.s32.totalorder %s38, %s41
      %p47 = scmp.eq.s32.totalorder %s16, 0
      %p48 = por %p46, %p47
      %p49 = scmp.ne.s32.totalorder %s38, %s41
      %p50 = scmp.eq.s32.totalorder %s21, 1
      %p51 = por %p49, %p50
      %p52 = scmp.ne.s32.totalorder %s41, %s42
      %p53 = scmp.eq.s32.totalorder %s21, 0
      %p54 = por %p52, %p53
      %p55 = scmp.ne.s32.totalorder %s41, %s42
      %p56 = scmp.eq.s32.totalorder %s22, 1
      %p57 = por %p55, %p56
      %p59 = scmp.ne.s32.totalorder %s42, %s58
      %p60 = scmp.eq.s32.totalorder %s22, 0
      %p61 = por %p59, %p60
      %s62 = ssub.s32 %s23, %s35
      %p63 = scmp.eq.s32.totalorder %s62, 0
      %s65 = sadd.s32 %s64, 1
      %s66 = scalar_select %p63, %s64, %s65
      %p69 = pneg %p63
      %p70 = scmp.eq.s32.totalorder %s16, 1
      %p71 = por %p69, %p70
      %p72 = scmp.ne.s32.totalorder %s64, %s67
      %p73 = scmp.eq.s32.totalorder %s16, 0
      %p74 = por %p72, %p73
      %p75 = scmp.ne.s32.totalorder %s64, %s67
      %p76 = scmp.eq.s32.totalorder %s21, 1
      %p77 = por %p75, %p76
      %p78 = scmp.ne.s32.totalorder %s67, %s68
      %p79 = scmp.eq.s32.totalorder %s21, 0
      %p80 = por %p78, %p79
      %p81 = scmp.ne.s32.totalorder %s67, %s68
      %p82 = scmp.eq.s32.totalorder %s22, 1
      %p83 = por %p81, %p82
      %p85 = scmp.ne.s32.totalorder %s68, %s84
      %p86 = scmp.eq.s32.totalorder %s22, 0
      %p87 = por %p85, %p86
      %s88 = ssub.s32 %s23, %s35
      %p89 = scmp.eq.s32.totalorder %s88, 0
      %s91 = sadd.s32 %s90, 1
      %s92 = scalar_select %p89, %s90, %s91
      %p95 = pneg %p89
      %p96 = scmp.eq.s32.totalorder %s16, 1
      %p97 = por %p95, %p96
      %p98 = scmp.ne.s32.totalorder %s90, %s93
      %p99 = scmp.eq.s32.totalorder %s16, 0
      %p100 = por %p98, %p99
      %p101 = scmp.ne.s32.totalorder %s90, %s93
      %p102 = scmp.eq.s32.totalorder %s21, 1
      %p103 = por %p101, %p102
      %p104 = scmp.ne.s32.totalorder %s93, %s94
      %p105 = scmp.eq.s32.totalorder %s21, 0
      %p106 = por %p104, %p105
      %p107 = scmp.ne.s32.totalorder %s93, %s94
      %p108 = scmp.eq.s32.totalorder %s22, 1
      %p109 = por %p107, %p108
      %p111 = scmp.ne.s32.totalorder %s94, %s110
      %p112 = scmp.eq.s32.totalorder %s22, 0
      %p113 = por %p111, %p112
      %s114 = ssub.s32 %s24, %s31
      %s115 = ssub.s32 %s23, %s35
      %s116 = sor.u32 %s114, %s115
      %p117 = scmp.eq.s32.totalorder %s116, 0
      %s119 = sadd.s32 %s118, 1
      %s120 = scalar_select %p117, %s118, %s119
      %p123 = pneg %p117
      %p124 = scmp.eq.s32.totalorder %s16, 1
      %p125 = por %p123, %p124
      %p126 = scmp.ne.s32.totalorder %s118, %s121
      %p127 = scmp.eq.s32.totalorder %s16, 0
      %p128 = por %p126, %p127
      %p129 = scmp.ne.s32.totalorder %s118, %s121
      %p130 = scmp.eq.s32.totalorder %s21, 1
      %p131 = por %p129, %p130
      %p132 = scmp.ne.s32.totalorder %s121, %s122
      %p133 = scmp.eq.s32.totalorder %s21, 0
      %p134 = por %p132, %p133
      %p135 = scmp.ne.s32.totalorder %s121, %s122
      %p136 = scmp.eq.s32.totalorder %s22, 1
      %p137 = por %p135, %p136
      %p139 = scmp.ne.s32.totalorder %s122, %s138
      %p140 = scmp.eq.s32.totalorder %s22, 0
      %p141 = por %p139, %p140
      %p142 = scmp.le.s32.totalorder 1, %s16
      %p143 = scmp.lt.s32.totalorder %s16, 3
      %p144 = pnand %p142, %p143
      %p145 = pneg %p144
      // Predicated region
      $region9: #{tpu_custom_call.1} parent=5 // pred_check
        _
      $region10: #{tpu_custom_call.1} parent=5 // pred_check_branch
        %147 = sbr.rel (%p144) target = $region12
      $region11: #{tpu_custom_call.1} parent=5 // pred_region
        %s148 = ssub.s32 %s16, 1
        // Predicated region
        $region13: #{tpu_custom_call.1} parent=11 // pred_check
          %p149 = pneg %p80
        $region14: #{tpu_custom_call.1} parent=11 // pred_check_branch
          %151 = sbr.rel (%p149) target = $region16
        $region15: #{tpu_custom_call.1} parent=11 // pred_region
          %s153 = ssub.s32 1024, 1024
          %154 = vsyncadd [#allocation6], %s153
          %s155 = smul.addr %s25, 64
          %s156 = scalar_lea.hbm %s1, %s155
          %s157 = sshll.u32 [#allocation5], 4
          %s158 = int_to_ptr.vmem [resolvable:$true] %s157
          %163 = dma.hbm_to_vmem [thread:$0]  %s156, 1024, %s158, [#allocation6], 64, 64, 4
        $region16: #{tpu_custom_call.1} parent=11 // pred_fallthru
          _
        // Predicated region
        $region17: #{tpu_custom_call.1} parent=11 // pred_check
          %p164 = pneg %p106
        $region18: #{tpu_custom_call.1} parent=11 // pred_check_branch
          %166 = sbr.rel (%p164) target = $region20
        $region19: #{tpu_custom_call.1} parent=11 // pred_region
          %p167 = scmp.lt.s32.totalorder %s25, 0
          %s168 = scalar_select %p167, %s25, 0
          %s169 = scalar_lea.vmem %s2, %s168
        $region20: #{tpu_custom_call.1} parent=11 // pred_fallthru
          _
      $region12: #{tpu_custom_call.1} parent=5 // pred_fallthru
        _
      %p170 = scmp.lt.s32.totalorder %s16, 2
      // Predicated region
      $region21: #{tpu_custom_call.1} parent=5 // pred_check
        %p171 = pneg %p170
      $region22: #{tpu_custom_call.1} parent=5 // pred_check_branch
        %173 = sbr.rel (%p171) target = $region24
      $region23: #{tpu_custom_call.1} parent=5 // pred_region
        // Predicated region
        $region25: #{tpu_custom_call.1} parent=23 // pred_check
          %p174 = pneg %p48
        $region26: #{tpu_custom_call.1} parent=23 // pred_check_branch
          %176 = sbr.rel (%p174) target = $region28
        $region27: #{tpu_custom_call.1} parent=23 // pred_region
          %s177 = sand.u32 %s38, 1
          %s178 = scalar_lea.sflag [#allocation3], %s177
          %s179 = sand.u32 %s38, 1
          %s180 = smul.addr %s179, 8
          %s181 = scalar_lea.vmem [#allocation2], %s180
          %s182 = smul.u32 2, %s24
          %s184 = ssub.s32 128, 128
          %185 = vsyncadd %s178, %s184
          %s186 = smul.addr %s182, 64
          %s187 = scalar_lea.hbm %s0, %s186
          %s188 = sshll.u32 %s181, 4
          %s189 = int_to_ptr.vmem [resolvable:$true] %s188
          %194 = dma.hbm_to_vmem [thread:$0]  %s187, 128, %s189, %s178, 64, 64, 4
        $region28: #{tpu_custom_call.1} parent=23 // pred_fallthru
          _
      $region24: #{tpu_custom_call.1} parent=5 // pred_fallthru
        _
      %p195 = scmp.le.s32.totalorder 1, %s16
      %p196 = scmp.lt.s32.totalorder %s16, 3
      %p197 = pnand %p195, %p196
      %p198 = pneg %p197
      // Predicated region
      $region29: #{tpu_custom_call.1} parent=5 // pred_check
        _
      $region30: #{tpu_custom_call.1} parent=5 // pred_check_branch
        %200 = sbr.rel (%p197) target = $region32
      $region31: #{tpu_custom_call.1} parent=5 // pred_region
        %s201 = ssub.s32 %s16, 1
        %s202 = sand.u32 %s41, 1
        %s203 = scalar_lea.sflag [#allocation3], %s202
        %s204 = sand.u32 %s41, 1
        %s205 = smul.addr %s204, 8
        %s206 = scalar_lea.vmem [#allocation2], %s205
        // Predicated region
        $region33: #{tpu_custom_call.1} parent=31 // pred_check
          %p207 = pneg %p54
        $region34: #{tpu_custom_call.1} parent=31 // pred_check_branch
          %209 = sbr.rel (%p207) target = $region36
        $region35: #{tpu_custom_call.1} parent=31 // pred_region
          %210 = dma.done %s203, 128
        $region36: #{tpu_custom_call.1} parent=31 // pred_fallthru
          _
        // Predicated region
        $region37: #{tpu_custom_call.1} parent=31 // pred_check
          %p211 = pneg %p80
        $region38: #{tpu_custom_call.1} parent=31 // pred_check_branch
          %213 = sbr.rel (%p211) target = $region40
        $region39: #{tpu_custom_call.1} parent=31 // pred_region
          %214 = dma.done [#allocation6], 1024
        $region40: #{tpu_custom_call.1} parent=31 // pred_fallthru
          _
        %s215 = sand.u32 %s41, 1
        %s216 = scalar_lea.sflag [#allocation3], %s215
        %s217 = sand.u32 %s41, 1
        %s218 = smul.addr %s217, 8
        %s219 = scalar_lea.vmem [#allocation2], %s218
        %p220 = pneg %p54
        %p221 = pneg %p51
        %p222 = pneg %p80
        %p223 = pneg %p77
        %p224 = scmp.lt.s32.totalorder %s25, 0
        %s225 = scalar_select %p224, %s25, 0
        %s226 = scalar_lea.vmem %s2, %s225
        %p227 = pneg %p106
        %p228 = pneg %p103
        %p229 = pneg %p134
        %p230 = pneg %p131
        %s231 = sand.u32 %s121, 1
        %s232 = scalar_lea.sflag [#allocation4], %s231
        %s233 = sand.u32 %s121, 1
        %s234 = smul.addr %s233, 8
        %s235 = scalar_lea.vmem [#allocation7], %s234
        %s236 = smul.u32 2, %s26
        %p237 = scmp.lt.s32.totalorder %s25, 0
        %s238 = scalar_select %p237, %s25, 0
        %s239 = scalar_lea.vmem %s2, %s238
        %s240 = smul.u32 2, %s26
        %v242 = vld [vmem:[%s206] sm:$0xf]
        %v243 = vld [vmem:[%s206 + $0x4] sm:$0xf]
        %v244 = vld [vmem:[#allocation5] sm:$0xf]
        %v245 = vld [vmem:[#allocation5 + $0x4] sm:$0xf]
        %v246 = vld [vmem:[#allocation5 + $0x8] sm:$0xf]
        %v247 = vld [vmem:[#allocation5 + $0xc] sm:$0xf]
        %v248 = vld [vmem:[#allocation5 + $0x10] sm:$0xf]
        %v249 = vld [vmem:[#allocation5 + $0x14] sm:$0xf]
        %v250 = vld [vmem:[#allocation5 + $0x18] sm:$0xf]
        %v251 = vld [vmem:[#allocation5 + $0x1c] sm:$0xf]
        %v252 = vld [vmem:[#allocation5 + $0x20] sm:$0xf]
        %v253 = vld [vmem:[#allocation5 + $0x24] sm:$0xf]
        %v254 = vld [vmem:[#allocation5 + $0x28] sm:$0xf]
        %v255 = vld [vmem:[#allocation5 + $0x2c] sm:$0xf]
        %v256 = vld [vmem:[#allocation5 + $0x30] sm:$0xf]
        %v257 = vld [vmem:[#allocation5 + $0x34] sm:$0xf]
        %v258 = vld [vmem:[#allocation5 + $0x38] sm:$0xf]
        %v259 = vld [vmem:[#allocation5 + $0x3c] sm:$0xf]
        %v260 = vld [vmem:[%s239] sm:$0x1]
        %v262 = vlaneseq
        %v263 = vshrl.u32 %v262, 7
        %v264 = vsub.s32 0, %v263
        %v265 = vrot.slane %v260, %v264
        %v269 = vunpack.c.l.b16 %v242
        %v270 = vunpack.c.l.b16 %v243
        %v271 = vpack.c.b16 %v270, %v269
        %v289 = vunpack.c.l.b16 %v244
        %v290 = vunpack.c.l.b16 %v245
        %v291 = vunpack.c.l.b16 %v246
        %v292 = vunpack.c.l.b16 %v247
        %v293 = vunpack.c.l.b16 %v248
        %v294 = vunpack.c.l.b16 %v249
        %v295 = vunpack.c.l.b16 %v250
        %v296 = vunpack.c.l.b16 %v251
        %v297 = vunpack.c.l.b16 %v252
        %v298 = vunpack.c.l.b16 %v253
        %v299 = vunpack.c.l.b16 %v254
        %v300 = vunpack.c.l.b16 %v255
        %v301 = vunpack.c.l.b16 %v256
        %v302 = vunpack.c.l.b16 %v257
        %v303 = vunpack.c.l.b16 %v258
        %v304 = vunpack.c.l.b16 %v259
        %v305 = vpack.c.b16 %v290, %v289
        %v306 = vpack.c.b16 %v292, %v291
        %v307 = vpack.c.b16 %v294, %v293
        %v308 = vpack.c.b16 %v296, %v295
        %v309 = vpack.c.b16 %v298, %v297
        %v310 = vpack.c.b16 %v300, %v299
        %v311 = vpack.c.b16 %v302, %v301
        %v312 = vpack.c.b16 %v304, %v303
        %321 = vmatprep.subr.bf16.mxu0 0
        %322 = vmatpush1.bf16.msra.mxu0 %v305
        %323 = vmatprep.subr.bf16.mxu0 0
        %324 = vmatpush1.bf16.msra.mxu0 %v306
        %325 = vmatprep.subr.bf16.mxu0 0
        %326 = vmatpush1.bf16.msra.mxu0 %v307
        %327 = vmatprep.subr.bf16.mxu0 0
        %328 = vmatpush1.bf16.msra.mxu0 %v308
        %329 = vmatprep.subr.bf16.mxu0 0
        %330 = vmatpush1.bf16.msra.mxu0 %v309
        %331 = vmatprep.subr.bf16.mxu0 0
        %332 = vmatpush1.bf16.msra.mxu0 %v310
        %333 = vmatprep.subr.bf16.mxu0 0
        %334 = vmatpush1.bf16.msra.mxu0 %v311
        %335 = vmatprep.subr.bf16.mxu0 0
        %336 = vmatpush1.bf16.msra.mxu0 %v312
        %337 = vmatprep.subr.bf16.mxu0 0
        %338 = vmatpush1.bf16.msra.mxu0 0
        %339 = vmatprep.subr.bf16.mxu0 0
        %340 = vmatpush1.bf16.msra.mxu0 0
        %341 = vmatprep.subr.bf16.mxu0 0
        %342 = vmatpush1.bf16.msra.mxu0 0
        %343 = vmatprep.subr.bf16.mxu0 0
        %344 = vmatpush1.bf16.msra.mxu0 0
        %345 = vmatprep.subr.bf16.mxu0 0
        %346 = vmatpush1.bf16.msra.mxu0 0
        %347 = vmatprep.subr.bf16.mxu0 0
        %348 = vmatpush1.bf16.msra.mxu0 0
        %349 = vmatprep.subr.bf16.mxu0 0
        %350 = vmatpush1.bf16.msra.mxu0 0
        %351 = vmatprep.subr.bf16.mxu0 0
        %352 = vmatpush1.bf16.msra.mxu0 0
        %353 = vmatprep.mubr.bf16.mxu0 0
        %354 = vmatmul.mubr.bf16.gmra.mrb[0].mxu0 %v271
        %v355 = vpop.f32.mrb[0].mxu0
        %v356 = vadd.f32 %v265, %v355
        %v357 = vpop.f32.mrb[0].mxu0
        %v358 = vpop.f32.mrb[0].mxu0
        %v359 = vadd.f32 %v265, %v358
        %v360 = vpop.f32.mrb[0].mxu0
        %361 = vdwg.mxu0
        %v362 = vmax.f32 %v356, 0.0
        %v363 = vmax.f32 %v359, 0.0
        %v364 = vpack.c.bf16 %v363, %v362
        %v366 = vunpack.c.l.b16 %v364
        %v367 = vunpack.c.h.b16 %v364
        %v368 = vpack.c.b16 %v366, %v366
        %v369 = vpack.c.b16 %v367, %v367
        %372 = vst [vmem:[%s235] sm:$0xf] %v368
        %373 = vst [vmem:[%s235 + $0x4] sm:$0xf] %v369
        %s374 = sand.u32 %s121, 1
        %s375 = scalar_lea.sflag [#allocation4], %s374
        %s376 = sand.u32 %s121, 1
        %s377 = smul.addr %s376, 8
        %s378 = scalar_lea.vmem [#allocation7], %s377
        // Predicated region
        $region41: #{tpu_custom_call.1} parent=31 // pred_check
          %p379 = pneg %p131
        $region42: #{tpu_custom_call.1} parent=31 // pred_check_branch
          %381 = sbr.rel (%p379) target = $region44
        $region43: #{tpu_custom_call.1} parent=31 // pred_region
          %s382 = smul.u32 2, %s26
          %s384 = ssub.s32 128, 128
          %385 = vsyncadd %s375, %s384
          %s386 = sadd.s32 %s25, %s382
          %s387 = smul.addr %s386, 64
          %s388 = scalar_lea.hbm %s3, %s387
          %s389 = sshll.u32 %s378, 4
          %s390 = int_to_ptr.vmem [resolvable:$true] %s389
          %395 = dma.vmem_to_hbm [thread:$0]  %s390, 128, %s388, %s375, 64, 64, 4
        $region44: #{tpu_custom_call.1} parent=31 // pred_fallthru
          _
      $region32: #{tpu_custom_call.1} parent=5 // pred_fallthru
        _
      %p396 = scmp.le.s32.totalorder 2, %s16
      // Predicated region
      $region45: #{tpu_custom_call.1} parent=5 // pred_check
        %p397 = pneg %p396
      $region46: #{tpu_custom_call.1} parent=5 // pred_check_branch
        %399 = sbr.rel (%p397) target = $region48
      $region47: #{tpu_custom_call.1} parent=5 // pred_region
        %s400 = ssub.s32 %s16, 2
        // Predicated region
        $region49: #{tpu_custom_call.1} parent=47 // pred_check
          %p401 = pneg %p137
        $region50: #{tpu_custom_call.1} parent=47 // pred_check_branch
          %403 = sbr.rel (%p401) target = $region52
        $region51: #{tpu_custom_call.1} parent=47 // pred_region
          %s404 = sand.u32 %s122, 1
          %s405 = scalar_lea.sflag [#allocation4], %s404
          %s406 = sand.u32 %s122, 1
          %s407 = smul.addr %s406, 8
          %s408 = scalar_lea.vmem [#allocation7], %s407
          %409 = dma.done %s405, 128
        $region52: #{tpu_custom_call.1} parent=47 // pred_fallthru
          _
      $region48: #{tpu_custom_call.1} parent=5 // pred_fallthru
        _
    $region6: #{tpu_custom_call.1} parent=1 // loop_footer
      %s20 = sadd.s32 1, %s16
    $region7: #{tpu_custom_call.1} parent=1 // loop_footer_branch
      %15 = sbr.rel target = $region3
    $region8: #{tpu_custom_call.1} parent=1 // loop_exit
      _
    %410 = vsyncpa [#allocation3], 1
    %s411 = scalar_lea.sflag [#allocation3], 1
    %412 = vsyncpa %s411, 1
    %413 = vsyncpa [#allocation6], 1
    %414 = vsyncpa [#allocation4], 1
    %s415 = scalar_lea.sflag [#allocation4], 1
    %416 = vsyncpa %s415, 1

</llo_original>
